<compile_context>
chip_gen: v7x
topology: tpu7x:2x2x1
jax: 0.10.0
libtpu: 0.0.40
codegen_flags: <defaults>
</compile_context>

<pallas_src>
import math

import jax
import jax.numpy as jnp
import numpy as np
from jax.experimental import pallas as pl
from jax.experimental.pallas import tpu as pltpu


def _vmem_limit_bytes(working_set_bytes):
    """Explicit scoped-VMEM budget: 2x headroom over block+scratch bytes,
    clamped to [32 MiB, 64 MiB] (legal on v7x's 64 MiB, above v5e/v6e defaults)."""
    return int(min(max(2 * working_set_bytes + (4 << 20), 32 << 20), 64 << 20))


# ---------------------------------------------------------------------------
# Linear kernels: (M, K) x (K, N) + b  (weights pre-transposed at param prep)
# ---------------------------------------------------------------------------

def _make_linear_kernel_single(compute_dtype):
    def kernel(x_ref, w_ref, b_ref, o_ref):
        acc = jnp.dot(x_ref[...].astype(compute_dtype),
                      w_ref[...].astype(compute_dtype),
                      preferred_element_type=jnp.float32)
        o_ref[...] = (acc + b_ref[...]).astype(o_ref.dtype)
    return kernel


def _make_linear_kernel_ktiled(compute_dtype):
    def kernel(x_ref, w_ref, b_ref, o_ref, acc_ref):
        @pl.when(pl.program_id(2) == 0)
        def _():
            acc_ref[...] = jnp.zeros_like(acc_ref)

        acc_ref[...] += jnp.dot(x_ref[...].astype(compute_dtype),
                                w_ref[...].astype(compute_dtype),
                                preferred_element_type=jnp.float32)

        @pl.when(pl.program_id(2) == pl.num_programs(2) - 1)
        def _():
            o_ref[...] = (acc_ref[...] + b_ref[...]).astype(o_ref.dtype)
    return kernel


def pallas_linear(x, w_t, b, *, compute_dtype=jnp.bfloat16, out_dtype=None,
                  tm=512, tn=512, tk=1024):
    """x: (M, K), w_t: (K, N) [pre-transposed], b: (N,) -> (M, N)."""
    M, K = x.shape
    Kw, N = w_t.shape
    assert K == Kw
    out_dtype = out_dtype if out_dtype is not None else x.dtype

    bm = M if M <= tm else tm
    bn = N if N <= tn else tn
    # Only tile K when it divides evenly; a padded K tail would add garbage
    # into the accumulator.
    bk = K if (K <= tk or K % tk != 0) else tk
    nm, nn, nk = pl.cdiv(M, bm), pl.cdiv(N, bn), K // bk

    b2 = b.reshape(1, N).astype(jnp.float32)

    ws = (2 * (bm * bk * x.dtype.itemsize + bk * bn * w_t.dtype.itemsize)
          + 2 * bm * bn * np.dtype(out_dtype).itemsize + 2 * bn * 4
          + (bm * bn * 4 if nk > 1 else 0))

    if nk == 1:
        return pl.pallas_call(
            _make_linear_kernel_single(compute_dtype),
            out_shape=jax.ShapeDtypeStruct((M, N), out_dtype),
            grid=(nm, nn),
            in_specs=[
                pl.BlockSpec((bm, K), lambda i, j: (i, 0)),
                pl.BlockSpec((K, bn), lambda i, j: (0, j)),
                pl.BlockSpec((1, bn), lambda i, j: (0, j)),
            ],
            out_specs=pl.BlockSpec((bm, bn), lambda i, j: (i, j)),
            compiler_params=pltpu.CompilerParams(
                dimension_semantics=("parallel", "parallel"),
                vmem_limit_bytes=_vmem_limit_bytes(ws)),
        )(x, w_t, b2)

    return pl.pallas_call(
        _make_linear_kernel_ktiled(compute_dtype),
        out_shape=jax.ShapeDtypeStruct((M, N), out_dtype),
        grid=(nm, nn, nk),
        in_specs=[
            pl.BlockSpec((bm, bk), lambda i, j, k: (i, k)),
            pl.BlockSpec((bk, bn), lambda i, j, k: (k, j)),
            pl.BlockSpec((1, bn), lambda i, j, k: (0, j)),
        ],
        out_specs=pl.BlockSpec((bm, bn), lambda i, j, k: (i, j)),
        scratch_shapes=[pltpu.VMEM((bm, bn), jnp.float32)],
        compiler_params=pltpu.CompilerParams(
            dimension_semantics=("parallel", "parallel", "arbitrary"),
            vmem_limit_bytes=_vmem_limit_bytes(ws)),
    )(x, w_t, b2)


# ---------------------------------------------------------------------------
# Flash-style multi-head attention
#   q: (B, L, H*E), k: (B, S, H*E), v: (B, S, H*Dv) -> (B, L, H*Dv)
#   grid = (B, num_q, num_kv); online softmax over the KV ("arbitrary") axis.
#   Scale is already folded into the Q projection.
# ---------------------------------------------------------------------------

def _make_attention_kernel(H, E, Dv, compute_dtype, need_mask):
    def kernel(*refs):
        if need_mask:
            q_ref, k_ref, v_ref, bias_ref, o_ref, m_sc, l_sc, acc_sc = refs
        else:
            q_ref, k_ref, v_ref, o_ref, m_sc, l_sc, acc_sc = refs
            bias_ref = None

        kv_i = pl.program_id(2)

        @pl.when(kv_i == 0)
        def _():
            m_sc[...] = jnp.full_like(m_sc, -jnp.inf)
            l_sc[...] = jnp.zeros_like(l_sc)
            acc_sc[...] = jnp.zeros_like(acc_sc)

        # Static unroll over heads (H is small).  Scratch is head-leading so
        # each per-head read-modify-write is an aligned (tq, Dv)/(tq, 1) tile.
        # TODO(synk): switch to lax.fori_loop over heads if H grows large
        # enough for vreg spills (needs 128-aligned per-head lane slices).
        for h in range(H):
            qh = q_ref[:, h * E:(h + 1) * E].astype(compute_dtype)
            kh = k_ref[:, h * E:(h + 1) * E].astype(compute_dtype)
            vh = v_ref[:, h * Dv:(h + 1) * Dv].astype(compute_dtype)

            s = jax.lax.dot_general(
                qh, kh, (((1,), (1,)), ((), ())),
                preferred_element_type=jnp.float32)          # (tq, tkv) f32
            if need_mask:
                s = s + bias_ref[...]                        # (1, tkv) bcast

            m_prev = m_sc[h]                                 # (tq, 1)
            m_new = jnp.maximum(m_prev, jnp.max(s, axis=-1, keepdims=True))
            alpha = jnp.exp(m_prev - m_new)
            p = jnp.exp(s - m_new)                           # (tq, tkv) f32
            l_sc[h] = alpha * l_sc[h] + jnp.sum(p, axis=-1, keepdims=True)
            acc_sc[h] = alpha * acc_sc[h] + jnp.dot(
                p.astype(compute_dtype), vh,
                preferred_element_type=jnp.float32)
            m_sc[h] = m_new

        @pl.when(kv_i == pl.num_programs(2) - 1)
        def _():
            for h in range(H):
                inv = pl.reciprocal(l_sc[h])                 # exact reciprocal
                o_ref[:, h * Dv:(h + 1) * Dv] = (
                    acc_sc[h] * inv).astype(o_ref.dtype)

    return kernel


def pallas_attention(q, k, v, n_heads, d_keys, d_values, *,
                     q_block=512, kv_block=1024, compute_dtype=None):
    """q: (B, L, H*E), k: (B, S, H*E), v: (B, S, H*Dv) -> (B, L, H*Dv)."""
    B, L, _ = q.shape
    S = k.shape[1]
    H, E, Dv = n_heads, d_keys, d_values
    compute_dtype = compute_dtype if compute_dtype is not None else q.dtype

    tq = L if L <= q_block else q_block
    if S <= kv_block:
        tkv, need_mask = S, False
    else:
        tkv = kv_block
        need_mask = (S % tkv) != 0
    num_kv = pl.cdiv(S, tkv)
    S_pad = num_kv * tkv
    num_q = pl.cdiv(L, tq)

    inputs = [q]
    in_specs = [pl.BlockSpec((None, tq, H * E), lambda b, qi, j: (b, qi, 0))]

    kk, vv = k, v
    if need_mask:
        pad = S_pad - S
        kk = jnp.pad(k, ((0, 0), (0, pad), (0, 0)))          # zeros
        vv = jnp.pad(v, ((0, 0), (0, pad), (0, 0)))          # zeros
    inputs += [kk, vv]
    in_specs += [
        pl.BlockSpec((None, tkv, H * E), lambda b, qi, j: (b, j, 0)),
        pl.BlockSpec((None, tkv, H * Dv), lambda b, qi, j: (b, j, 0)),
    ]
    if need_mask:
        # Additive bias: 0 for valid columns, -1e30 for the padded tail.
        col = jnp.arange(S_pad, dtype=jnp.int32).reshape(num_kv, 1, tkv)
        bias = jnp.where(col < S, 0.0, -1e30).astype(jnp.float32)
        inputs.append(bias)
        in_specs.append(pl.BlockSpec((None, 1, tkv), lambda b, qi, j: (j, 0, 0)))

    isz = q.dtype.itemsize
    ws = (2 * tq * H * E * isz          # q (double-buffered)
          + 2 * tkv * H * E * isz       # k
          + 2 * tkv * H * Dv * isz      # v
          + 2 * tq * H * Dv * isz       # out
          + H * tq * (Dv + 2) * 4)      # f32 acc/m/l scratch
    if need_mask:
        ws += 2 * tkv * 4

    return pl.pallas_call(
        _make_attention_kernel(H, E, Dv, compute_dtype, need_mask),
        out_shape=jax.ShapeDtypeStruct((B, L, H * Dv), q.dtype),
        grid=(B, num_q, num_kv),
        in_specs=in_specs,
        # Output block index constant across the KV axis -> accumulator stays
        # VMEM-resident; written back to HBM once per (batch, q-tile).
        out_specs=pl.BlockSpec((None, tq, H * Dv), lambda b, qi, j: (b, qi, 0)),
        scratch_shapes=[
            pltpu.VMEM((H, tq, 1), jnp.float32),     # running max m
            pltpu.VMEM((H, tq, 1), jnp.float32),     # running denom l
            pltpu.VMEM((H, tq, Dv), jnp.float32),    # output accumulator
        ],
        compiler_params=pltpu.CompilerParams(
            dimension_semantics=("parallel", "parallel", "arbitrary"),
            vmem_limit_bytes=_vmem_limit_bytes(ws)),
    )(*inputs)


# ---------------------------------------------------------------------------
# Parameter prep: transpose weights once, fold 1/sqrt(E) into Q projection,
# optionally store weights in bf16, and build a fused QKV weight.
# ---------------------------------------------------------------------------

def prepare_params(params, *, compute_dtype=jnp.bfloat16):
    H = params["n_heads"]
    d_keys = params["wq"].shape[0] // H
    d_values = params["wv"].shape[0] // H
    scale = 1.0 / math.sqrt(d_keys)      # FullAttention default scale

    wq_t = (params["wq"] * scale).T.astype(compute_dtype)   # (d_model, H*E)
    wk_t = params["wk"].T.astype(compute_dtype)
    wv_t = params["wv"].T.astype(compute_dtype)
    wo_t = params["wo"].T.astype(compute_dtype)
    bq = (params["bq"] * scale).astype(jnp.float32)
    bk = params["bk"].astype(jnp.float32)
    bv = params["bv"].astype(jnp.float32)
    bo = params["bo"].astype(jnp.float32)

    return dict(
        n_heads=H, d_keys=d_keys, d_values=d_values,
        compute_dtype=compute_dtype,
        wq_t=wq_t, wk_t=wk_t, wv_t=wv_t, wo_t=wo_t,
        bq=bq, bk=bk, bv=bv, bo=bo,
        wqkv_t=jnp.concatenate([wq_t, wk_t, wv_t], axis=1),
        bqkv=jnp.concatenate([bq, bk, bv]),
    )


# ---------------------------------------------------------------------------
# AttentionLayer forward
# ---------------------------------------------------------------------------

def attention_layer_forward(prep, queries, keys, values, attn_mask=None,
                            tau=None, delta=None, *, q_block=512, kv_block=1024):
    if attn_mask is not None:
        # TODO(synk): Informer TriangularCausalMask path not implemented; only
        # FullAttention(mask_flag=False) is supported.
        raise NotImplementedError("attn_mask is not supported by this kernel")
    del tau, delta  # unused by FullAttention(mask_flag=False)

    B, L, d_model = queries.shape
    _, S, _ = keys.shape
    H = prep["n_heads"]
    E, Dv = prep["d_keys"], prep["d_values"]
    cdt = prep["compute_dtype"]

    if queries is keys and keys is values:
        # Self-attention: fused QKV projection (one kernel, x read once).
        qkv = pallas_linear(queries.reshape(B * L, d_model), prep["wqkv_t"],
                            prep["bqkv"], compute_dtype=cdt, out_dtype=cdt)
        q = qkv[:, :H * E]
        k = qkv[:, H * E:2 * H * E]
        v = qkv[:, 2 * H * E:]
    else:
        q = pallas_linear(queries.reshape(B * L, d_model), prep["wq_t"],
                          prep["bq"], compute_dtype=cdt, out_dtype=cdt)
        k = pallas_linear(keys.reshape(B * S, d_model), prep["wk_t"],
                          prep["bk"], compute_dtype=cdt, out_dtype=cdt)
        v = pallas_linear(values.reshape(B * S, d_model), prep["wv_t"],
                          prep["bv"], compute_dtype=cdt, out_dtype=cdt)

    # Lane-dense (B, L, H*E) / (B, S, H*E) / (B, S, H*Dv): no HBM transposes.
    ctx = pallas_attention(q.reshape(B, L, H * E),
                           k.reshape(B, S, H * E),
                           v.reshape(B, S, H * Dv),
                           H, E, Dv, q_block=q_block, kv_block=kv_block,
                           compute_dtype=cdt)                # (B, L, H*Dv)

    out = pallas_linear(ctx.reshape(B * L, H * Dv), prep["wo_t"], prep["bo"],
                        compute_dtype=cdt,
                        out_dtype=queries.dtype).reshape(B, L, d_model)
    attn = None  # output_attention=False
    return out, attn


# ---------------------------------------------------------------------------
# Deterministic parameter init (PyTorch nn.Linear-style uniform)
# ---------------------------------------------------------------------------

def init_params(key, d_model, n_heads, d_keys=None, d_values=None):
    d_keys = d_keys or d_model // n_heads
    d_values = d_values or d_model // n_heads

    def lin(k, out_f, in_f):
        k1, k2 = jax.random.split(k)
        bound = 1.0 / math.sqrt(in_f)
        w = jax.random.uniform(k1, (out_f, in_f), jnp.float32, -bound, bound)
        b = jax.random.uniform(k2, (out_f,), jnp.float32, -bound, bound)
        return w, b

    ks = jax.random.split(key, 4)
    wq, bq = lin(ks[0], d_keys * n_heads, d_model)
    wk, bk = lin(ks[1], d_keys * n_heads, d_model)
    wv, bv = lin(ks[2], d_values * n_heads, d_model)
    wo, bo = lin(ks[3], d_model, d_values * n_heads)
    return dict(wq=wq, bq=bq, wk=wk, bk=bk, wv=wv, bv=bv, wo=wo, bo=bo,
                n_heads=n_heads)


# ---------------------------------------------------------------------------
# Pure-JAX reference for correctness
# ---------------------------------------------------------------------------

def reference_forward(params, queries, keys, values):
    B, L, d_model = queries.shape
    _, S, _ = keys.shape
    H = params["n_heads"]
    q = (queries @ params["wq"].T + params["bq"]).reshape(B, L, H, -1)
    k = (keys @ params["wk"].T + params["bk"]).reshape(B, S, H, -1)
    v = (values @ params["wv"].T + params["bv"]).reshape(B, S, H, -1)
    E = q.shape[-1]
    scores = jnp.einsum("blhe,bshe->bhls", q, k) / jnp.sqrt(jnp.float32(E))
    a = jax.nn.softmax(scores, axis=-1)
    out = jnp.einsum("bhls,bshd->blhd", a, v).reshape(B, L, -1)
    return out @ params["wo"].T + params["bo"]


if __name__ == "__main__":
    B, L, S = 2, 8, 8
    d_model, n_heads = 32, 4

    key = jax.random.PRNGKey(0)
    kp, kq, kk_, kv_, k2a, k2b = jax.random.split(key, 6)
    params = init_params(kp, d_model, n_heads)

    queries = jax.random.normal(kq, (B, L, d_model), jnp.float32)
    keys = jax.random.normal(kk_, (B, S, d_model), jnp.float32)
    values = jax.random.normal(kv_, (B, S, d_model), jnp.float32)

    ref = reference_forward(params, queries, keys, values)

    # f32 operand path (cross-attention: separate Q/K/V projections).
    prep32 = prepare_params(params, compute_dtype=jnp.float32)
    out, attn = attention_layer_forward(prep32, queries, keys, values)
    out = jax.block_until_ready(out)
    assert attn is None
    np.testing.assert_allclose(np.asarray(out), np.asarray(ref),
                               rtol=2e-3, atol=2e-3)

    # Self-attention exercises the fused QKV projection path.
    ref_self = reference_forward(params, queries, queries, queries)
    out_self, _ = attention_layer_forward(prep32, queries, queries, queries)
    out_self = jax.block_until_ready(out_self)
    np.testing.assert_allclose(np.asarray(out_self), np.asarray(ref_self),
                               rtol=2e-3, atol=2e-3)

    # Ragged KV tail + q-tiling: S % tkv != 0 exercises the padded/bias path.
    q2 = jax.random.normal(k2a, (B, 16, d_model), jnp.float32)
    kv2 = jax.random.normal(k2b, (B, 40, d_model), jnp.float32)
    ref2 = reference_forward(params, q2, kv2, kv2)
    out2, _ = attention_layer_forward(prep32, q2, kv2, kv2,
                                      q_block=8, kv_block=16)
    out2 = jax.block_until_ready(out2)
    np.testing.assert_allclose(np.asarray(out2), np.asarray(ref2),
                               rtol=2e-3, atol=2e-3)

    # bf16 MXU-operand path (f32 softmax + f32 accumulation) -> looser tol.
    prep16 = prepare_params(params, compute_dtype=jnp.bfloat16)
    out16, _ = attention_layer_forward(prep16, queries, keys, values)
    out16 = jax.block_until_ready(out16)
    np.testing.assert_allclose(np.asarray(out16), np.asarray(ref),
                               rtol=5e-2, atol=5e-2)

    print("KERNEL_OK")
</pallas_src>

<mosaic_0001>
module attributes {stable_mosaic.version = 11 : i64} {
  func.func @kernel(%arg0: i32, %arg1: i32, %arg2: memref<16x32xf32, #tpu.memory_space<vmem>>, %arg3: memref<32x32xf32, #tpu.memory_space<vmem>>, %arg4: memref<1x32xf32, #tpu.memory_space<vmem>>, %arg5: memref<16x32xf32, #tpu.memory_space<vmem>>) attributes {dimension_semantics = [#tpu.dimension_semantics<parallel>, #tpu.dimension_semantics<parallel>], iteration_bounds = array<i64: 1, 1>, scalar_prefetch = 0 : i64, scratch_operands = 0 : i64, tpu.core_type = #tpu.core_type<tc>, window_params = [{transform_indices = @transform_0, window_bounds = array<i64: 16, 32>}, {transform_indices = @transform_1, window_bounds = array<i64: 32, 32>}, {transform_indices = @transform_2, window_bounds = array<i64: 1, 32>}, {transform_indices = @transform_3, window_bounds = array<i64: 16, 32>}]} {
    %c0 = arith.constant 0 : index
    %c0_0 = arith.constant 0 : index
    %0 = vector.load %arg2[%c0, %c0_0] : memref<16x32xf32, #tpu.memory_space<vmem>>, vector<16x32xf32>
    %c0_1 = arith.constant 0 : index
    %c0_2 = arith.constant 0 : index
    %1 = vector.load %arg3[%c0_1, %c0_2] : memref<32x32xf32, #tpu.memory_space<vmem>>, vector<32x32xf32>
    %cst = arith.constant dense<0.000000e+00> : vector<16x32xf32>
    %2 = tpu.matmul %0, %1, %cst {dimension_numbers = #tpu.dot_dimension_numbers<[1], [0], [0], [1], [0, 0, 1, 1], [], []>} : vector<16x32xf32>, vector<32x32xf32>, vector<16x32xf32> -> vector<16x32xf32>
    %c0_3 = arith.constant 0 : index
    %c0_4 = arith.constant 0 : index
    %3 = vector.load %arg4[%c0_3, %c0_4] : memref<1x32xf32, #tpu.memory_space<vmem>>, vector<1x32xf32>
    %4 = vector.broadcast %3 : vector<1x32xf32> to vector<16x32xf32>
    %5 = arith.addf %2, %4 : vector<16x32xf32>
    %c0_5 = arith.constant 0 : index
    %c0_6 = arith.constant 0 : index
    %6 = vector.load %arg5[%c0_5, %c0_6] : memref<16x32xf32, #tpu.memory_space<vmem>>, vector<16x32xf32>
    tpu.vector_store %arg5[%c0_5, %c0_6], %5 {strides = array<i32>} : memref<16x32xf32, #tpu.memory_space<vmem>>, vector<16x32xf32>,
    return
  }
  func.func @transform_0(%arg0: i32, %arg1: i32) -> (i32, i32) {
    %c0_i32 = arith.constant 0 : i32
    %c0_i32_0 = arith.constant 0 : i32
    return %arg0, %c0_i32 : i32, i32
  }
  func.func @transform_1(%arg0: i32, %arg1: i32) -> (i32, i32) {
    %c0_i32 = arith.constant 0 : i32
    %c0_i32_0 = arith.constant 0 : i32
    return %c0_i32, %arg1 : i32, i32
  }
  func.func @transform_2(%arg0: i32, %arg1: i32) -> (i32, i32) {
    %c0_i32 = arith.constant 0 : i32
    %c0_i32_0 = arith.constant 0 : i32
    return %c0_i32, %arg1 : i32, i32
  }
  func.func @transform_3(%arg0: i32, %arg1: i32) -> (i32, i32) {
    %c0_i32 = arith.constant 0 : i32
    return %arg0, %arg1 : i32, i32
  }
}

</mosaic_0001>

<llo_original>
// kernel: tpu_custom_call.1
$region0: #{tpu_custom_call.1}
  #allocation0 [shape = 'u32[]', space=smem, size = 0x4, offset = 0x4, fixed_abs, tag = 'smem constant byte address 0x4 - core index']
  #allocation1 [shape = 'u32[144,128]{1,0:T(1,128)}', space=vmem, size = 0x12000, scoped, tag = 'internal scratch']
  %s0 = inlined_call_operand.hbm [shape: f32[16,32], index: 0, kind: input, shape index: {}]
  %s1 = inlined_call_operand.hbm [shape: f32[32,32], index: 1, kind: input, shape index: {}]
  %s2 = inlined_call_operand.vmem [shape: f32[1,32], index: 2, kind: input, shape index: {}]
  %s3 = inlined_call_operand.hbm [shape: f32[16,32], index: 3, kind: output, shape index: {}]
  %s4 = sld [smem:[#allocation0]]
  $region30: #{tpu_custom_call.1} parent=0
    _
  %s6 = ssub.s32 1, %s4
  %s7 = scalar_select 0, %s6, %s4
  $region1: #{tpu_custom_call.1} parent=0
    #allocation2 [shape = 'u8[8192]{0}', space=vmem, size = 0x2000, scoped, tag = 'input window, operand 0, single buffered']
    #allocation3 [shape = 's32[1]{0}', space=sflag, size = 0x4, scoped, tag = 'scoped memory for tpu_custom_call.1']
    #allocation4 [shape = 's32[1]{0}', space=sflag, size = 0x4, scoped, tag = 'scoped memory for tpu_custom_call.1']
    #allocation5 [shape = 'u8[16384]{0}', space=vmem, size = 0x4000, scoped, tag = 'input window, operand 1, single buffered']
    #allocation6 [shape = 's32[1]{0}', space=sflag, size = 0x4, scoped, tag = 'scoped memory for tpu_custom_call.1']
    #allocation7 [shape = 'u8[8192]{0}', space=vmem, size = 0x2000, scoped, tag = 'output window, operand 0, single buffered']
    %8 = vsyncpa [#allocation3], 0
    %9 = vsyncpa [#allocation6], 0
    %10 = vsyncpa [#allocation4], 0
    // Predicated region
    $region2: #{tpu_custom_call.1} parent=1 // pred_check
      _
    $region3: #{tpu_custom_call.1} parent=1 // pred_check_branch
      %12 = sbr.rel (0) target = $region5
    $region4: #{tpu_custom_call.1} parent=1 // pred_region
      %s14 = ssub.s32 256, 256
      %15 = vsyncadd [#allocation3], %s14
      %s16 = sshll.u32 [#allocation2], 4
      %s17 = int_to_ptr.vmem [resolvable:$true] %s16
      %22 = dma.hbm_to_vmem [thread:$0]  %s0, 256, %s17, [#allocation3], 128, 128, 8
    $region5: #{tpu_custom_call.1} parent=1 // pred_fallthru
      _
    // Predicated region
    $region6: #{tpu_custom_call.1} parent=1 // pred_check
      _
    $region7: #{tpu_custom_call.1} parent=1 // pred_check_branch
      %24 = sbr.rel (0) target = $region9
    $region8: #{tpu_custom_call.1} parent=1 // pred_region
      %s26 = ssub.s32 512, 512
      %27 = vsyncadd [#allocation6], %s26
      %s28 = sshll.u32 [#allocation5], 4
      %s29 = int_to_ptr.vmem [resolvable:$true] %s28
      %34 = dma.hbm_to_vmem [thread:$0]  %s1, 512, %s29, [#allocation6], 128, 128, 8
    $region9: #{tpu_custom_call.1} parent=1 // pred_fallthru
      _
    // Predicated region
    $region10: #{tpu_custom_call.1} parent=1 // pred_check
      _
    $region11: #{tpu_custom_call.1} parent=1 // pred_check_branch
      %36 = sbr.rel (0) target = $region13
    $region12: #{tpu_custom_call.1} parent=1 // pred_region
      _
    $region13: #{tpu_custom_call.1} parent=1 // pred_fallthru
      _
    // Predicated region
    $region14: #{tpu_custom_call.1} parent=1 // pred_check
      _
    $region15: #{tpu_custom_call.1} parent=1 // pred_check_branch
      %38 = sbr.rel (0) target = $region17
    $region16: #{tpu_custom_call.1} parent=1 // pred_region
      %39 = dma.done [#allocation3], 256
    $region17: #{tpu_custom_call.1} parent=1 // pred_fallthru
      _
    // Predicated region
    $region18: #{tpu_custom_call.1} parent=1 // pred_check
      _
    $region19: #{tpu_custom_call.1} parent=1 // pred_check_branch
      %41 = sbr.rel (0) target = $region21
    $region20: #{tpu_custom_call.1} parent=1 // pred_region
      %42 = dma.done [#allocation6], 512
    $region21: #{tpu_custom_call.1} parent=1 // pred_fallthru
      _
    %v43 = vld [vmem:[#allocation2] sm:$0xff]
    %v44 = vld [vmem:[#allocation2 + $0x8] sm:$0xff]
    %v45 = vld [vmem:[#allocation5] sm:$0xff]
    %v46 = vld [vmem:[#allocation5 + $0x8] sm:$0xff]
    %v47 = vld [vmem:[#allocation5 + $0x10] sm:$0xff]
    %v48 = vld [vmem:[#allocation5 + $0x18] sm:$0xff]
    %v49 = vld [vmem:[%s2] sm:$0x1]
    %v51 = vlaneseq
    %v52 = vshrl.u32 %v51, 7
    %v53 = vsub.s32 0, %v52
    %v54 = vrot.slane %v49, %v53
    %vm56 = vcmask 261120
    %v58 = vsel %vm56, %v43, 0
    %v61 = vsel %vm56, %v44, 0
    %63 = vmatprep.subr.mxu0 0.0
    %64 = vmatpush1.msra.mxu0 %v45
    %65 = vmatprep.subr.mxu0 0.0
    %66 = vmatpush1.msra.mxu0 %v46
    %67 = vmatprep.subr.mxu0 0.0
    %68 = vmatpush1.msra.mxu0 %v47
    %69 = vmatprep.subr.mxu0 0.0
    %70 = vmatpush1.msra.mxu0 %v48
    %71 = vmatprep.subr.mxu0 0.0
    %72 = vmatpush1.msra.mxu0 0.0
    %73 = vmatprep.subr.mxu0 0.0
    %74 = vmatpush1.msra.mxu0 0.0
    %75 = vmatprep.subr.mxu0 0.0
    %76 = vmatpush1.msra.mxu0 0.0
    %77 = vmatprep.subr.mxu0 0.0
    %78 = vmatpush1.msra.mxu0 0.0
    %79 = vmatprep.subr.mxu0 0.0
    %80 = vmatpush1.msra.mxu0 0.0
    %81 = vmatprep.subr.mxu0 0.0
    %82 = vmatpush1.msra.mxu0 0.0
    %83 = vmatprep.subr.mxu0 0.0
    %84 = vmatpush1.msra.mxu0 0.0
    %85 = vmatprep.subr.mxu0 0.0
    %86 = vmatpush1.msra.mxu0 0.0
    %87 = vmatprep.subr.mxu0 0.0
    %88 = vmatpush1.msra.mxu0 0.0
    %89 = vmatprep.subr.mxu0 0.0
    %90 = vmatpush1.msra.mxu0 0.0
    %91 = vmatprep.subr.mxu0 0.0
    %92 = vmatpush1.msra.mxu0 0.0
    %93 = vmatprep.subr.mxu0 0.0
    %94 = vmatpush1.msra.mxu0 0.0
    %95 = vmatprep.subr.mxu0 0.0
    %96 = vmatpush1.msra.mxu0 0.0
    %97 = vmatprep.subr.mxu0 0.0
    %98 = vmatpush1.msra.mxu0 0.0
    %99 = vmatprep.subr.mxu0 0.0
    %100 = vmatpush1.msra.mxu0 0.0
    %101 = vmatprep.subr.mxu0 0.0
    %102 = vmatpush1.msra.mxu0 0.0
    %103 = vmatprep.subr.mxu0 0.0
    %104 = vmatpush1.msra.mxu0 0.0
    %105 = vmatprep.subr.mxu0 0.0
    %106 = vmatpush1.msra.mxu0 0.0
    %107 = vmatprep.subr.mxu0 0.0
    %108 = vmatpush1.msra.mxu0 0.0
    %109 = vmatprep.subr.mxu0 0.0
    %110 = vmatpush1.msra.mxu0 0.0
    %111 = vmatprep.subr.mxu0 0.0
    %112 = vmatpush1.msra.mxu0 0.0
    %113 = vmatprep.subr.mxu0 0.0
    %114 = vmatpush1.msra.mxu0 0.0
    %115 = vmatprep.subr.mxu0 0.0
    %116 = vmatpush1.msra.mxu0 0.0
    %117 = vmatprep.subr.mxu0 0.0
    %118 = vmatpush1.msra.mxu0 0.0
    %119 = vmatprep.subr.mxu0 0.0
    %120 = vmatpush1.msra.mxu0 0.0
    %121 = vmatprep.subr.mxu0 0.0
    %122 = vmatpush1.msra.mxu0 0.0
    %123 = vmatprep.subr.mxu0 0.0
    %124 = vmatpush1.msra.mxu0 0.0
    %125 = vmatprep.subr.mxu0 0.0
    %126 = vmatpush1.msra.mxu0 0.0
    %127 = vmatprep.mubr.f32.mxu0 0.0
    %128 = vmatmul.mubr.f32.gmra.mrb[0].mxu0 %v58
    %v129 = vpop.f32.mrb[0].mxu0
    %v130 = vadd.f32 %v54, %v129
    %v131 = vpop.f32.mrb[0].mxu0
    %132 = vmatprep.mubr.f32.mxu0 0.0
    %133 = vmatmul.mubr.f32.gmra.mrb[0].mxu0 %v61
    %v134 = vpop.f32.mrb[0].mxu0
    %v135 = vadd.f32 %v54, %v134
    %v136 = vpop.f32.mrb[0].mxu0
    %137 = vdwg.mxu0
    %138 = vst.msk [vmem:[#allocation7] sm:$0xff] %vm56, %v130
    %139 = vst.msk [vmem:[#allocation7 + $0x8] sm:$0xff] %vm56, %v135
    // Predicated region
    $region22: #{tpu_custom_call.1} parent=1 // pred_check
      _
    $region23: #{tpu_custom_call.1} parent=1 // pred_check_branch
      %141 = sbr.rel (0) target = $region25
    $region24: #{tpu_custom_call.1} parent=1 // pred_region
      %s143 = ssub.s32 256, 256
      %144 = vsyncadd [#allocation4], %s143
      %s145 = sshll.u32 [#allocation7], 4
      %s146 = int_to_ptr.vmem [resolvable:$true] %s145
      %151 = dma.vmem_to_hbm [thread:$0]  %s146, 256, %s3, [#allocation4], 128, 128, 8
    $region25: #{tpu_custom_call.1} parent=1 // pred_fallthru
      _
    // Predicated region
    $region26: #{tpu_custom_call.1} parent=1 // pred_check
      _
    $region27: #{tpu_custom_call.1} parent=1 // pred_check_branch
      %153 = sbr.rel (0) target = $region29
    $region28: #{tpu_custom_call.1} parent=1 // pred_region
      %154 = dma.done [#allocation4], 256
    $region29: #{tpu_custom_call.1} parent=1 // pred_fallthru
      _
    %155 = vsyncpa [#allocation3], 1
    %156 = vsyncpa [#allocation6], 1
    %157 = vsyncpa [#allocation4], 1

</llo_original>
